<compile_context>
chip_gen: v5e
topology: v5e:2x2
jax: 0.10.0
libtpu: 0.0.40
codegen_flags: <defaults>
</compile_context>

<pallas_src>
import jax
import jax.numpy as jnp
from jax.experimental import pallas as pl
from jax.experimental.pallas import tpu as pltpu


def _round_up(x, m):
    return ((x + m - 1) // m) * m


def _projector_kernel(xe_ref, xc_ref, we_ref, wc_ref, b_ref, out_ref):
    # xe_ref:  [TN, E]   row tile of embedding features
    # xc_ref:  [TN, C]   row tile of continuous features
    # we_ref:  [E,  D]   resident across the grid
    # wc_ref:  [C,  D]   resident across the grid
    # b_ref:   [1,  D]   resident across the grid
    # out_ref: [TN, D]
    acc = jnp.dot(xe_ref[...], we_ref[...], preferred_element_type=jnp.float32)
    acc = acc + jnp.dot(xc_ref[...], wc_ref[...],
                        preferred_element_type=jnp.float32)
    acc = acc + b_ref[...]  # broadcast bias row over TN rows (f32)
    out_ref[...] = acc.astype(out_ref.dtype)


def hf_input_projector(embedding_out, continuous_features, weight, bias,
                       *, tile_rows=4096, compute_dtype=None):
    """
    Args:
        embedding_out:       [B, T, S, E]
        continuous_features: [B, T, S, C]
        weight:              [D, E + C]  (nn.Linear convention: [out, in])
        bias:                [D]
        tile_rows:           row-tile size (multiple of 8; sweep 2048..8192)
        compute_dtype:       optional operand dtype (e.g. jnp.bfloat16);
                             accumulation is always float32.
    Returns:
        projected_input:     [B, T, S, D] (same dtype as embedding_out)
    """
    B, T, S, E = embedding_out.shape
    C = continuous_features.shape[-1]
    D = weight.shape[0]
    assert weight.shape[1] == E + C

    N = B * T * S
    out_dtype = embedding_out.dtype

    # Zero-copy reshapes of the contiguous input slabs.
    xe = embedding_out.reshape(N, E)
    xc = continuous_features.reshape(N, C)

    # Split the [D, E+C] weight into two transposed slabs (tiny; VMEM-resident).
    w_e = weight[:, :E].T  # [E, D]
    w_c = weight[:, E:].T  # [C, D]
    b2d = bias.reshape(1, D).astype(jnp.float32)

    if compute_dtype is not None:
        xe = xe.astype(compute_dtype)
        xc = xc.astype(compute_dtype)
        w_e = w_e.astype(compute_dtype)
        w_c = w_c.astype(compute_dtype)

    # Row tiling: TN multiple of 8, capped so the grid stays >= 2 (keeps both
    # v7x TensorCores busy via the "parallel" axis).  The grid uses cdiv, so a
    # partial last block is masked by Pallas — no row padding / slicing.
    TN = min(tile_rows, _round_up(pl.cdiv(N, 2), 8))
    TN = max(TN, 8)
    grid = (pl.cdiv(N, TN),)

    # Explicit VMEM budget: double buffers for every input/output tile
    # (Pallas double-buffers even constant-index_map operands), plus headroom.
    isz_in = jnp.dtype(xe.dtype).itemsize
    isz_w = jnp.dtype(w_e.dtype).itemsize
    isz_out = jnp.dtype(out_dtype).itemsize
    in_tile_bytes = TN * (E + C) * isz_in
    out_tile_bytes = TN * D * isz_out
    w_bytes = (E + C) * D * isz_w + D * 4
    vmem_limit = 2 * (in_tile_bytes + out_tile_bytes + w_bytes) + (4 << 20)
    vmem_limit = int(min(max(vmem_limit, 8 << 20), 48 << 20))

    out2d = pl.pallas_call(
        _projector_kernel,
        out_shape=jax.ShapeDtypeStruct((N, D), out_dtype),
        grid_spec=pltpu.PrefetchScalarGridSpec(
            num_scalar_prefetch=0,
            grid=grid,
            in_specs=[
                pl.BlockSpec((TN, E), lambda i: (i, 0)),   # embedding row tile
                pl.BlockSpec((TN, C), lambda i: (i, 0)),   # continuous row tile
                pl.BlockSpec((E, D), lambda i: (0, 0)),    # W_e, resident
                pl.BlockSpec((C, D), lambda i: (0, 0)),    # W_c, resident
                pl.BlockSpec((1, D), lambda i: (0, 0)),    # bias, resident
            ],
            out_specs=pl.BlockSpec((TN, D), lambda i: (i, 0)),
        ),
        compiler_params=pltpu.CompilerParams(
            dimension_semantics=("parallel",),
            vmem_limit_bytes=vmem_limit,
        ),
    )(xe, xc, w_e, w_c, b2d)

    # N*D contiguous -> free bitcast reshape (no slice needed).
    return out2d.reshape(B, T, S, D)


if __name__ == "__main__":
    # Small shapes consistent with the module's forward:
    #   embedding_out:       [B, T, S, E]
    #   continuous_features: [B, T, S, C]
    B, T, S, E, C, D = 2, 8, 4, 16, 16, 32

    key = jax.random.PRNGKey(0)
    k_emb, k_cont, k_w, k_b = jax.random.split(key, 4)

    embedding_out = jax.random.normal(k_emb, (B, T, S, E), dtype=jnp.float32)
    continuous_features = jax.random.normal(k_cont, (B, T, S, C),
                                            dtype=jnp.float32)

    # Deterministic synthetic nn.Linear parameters (uniform like torch init).
    total_in = E + C
    bound = 1.0 / (total_in ** 0.5)
    weight = jax.random.uniform(k_w, (D, total_in), minval=-bound, maxval=bound,
                                dtype=jnp.float32)
    bias = jax.random.uniform(k_b, (D,), minval=-bound, maxval=bound,
                              dtype=jnp.float32)

    projector = jax.jit(hf_input_projector,
                        static_argnames=("tile_rows", "compute_dtype"))

    # Pure-JAX reference (concat + linear).
    x = jnp.concatenate([embedding_out, continuous_features], axis=-1)
    ref = jnp.einsum("btsi,oi->btso", x, weight) + bias

    # Test 1: default tiling (grid capped to >= 2 tiles).
    out = jax.block_until_ready(
        projector(embedding_out, continuous_features, weight, bias))
    assert out.shape == (B, T, S, D)
    assert jnp.allclose(out, ref, atol=1e-5, rtol=1e-5), "mismatch (default TN)"

    # Test 2: multi-tile path with a remainder block (N=64, TN=24 -> grid=3,
    # last block partial) to exercise the masked boundary write.
    out_small = jax.block_until_ready(
        projector(embedding_out, continuous_features, weight, bias,
                  tile_rows=24))
    assert jnp.allclose(out_small, ref, atol=1e-5, rtol=1e-5), \
        "mismatch (remainder tile)"

    print("KERNEL_OK")
</pallas_src>

<mosaic_0001>
module attributes {stable_mosaic.version = 11 : i64} {
  func.func @_projector_kernel(%arg0: i32, %arg1: memref<32x16xf32, #tpu.memory_space<vmem>>, %arg2: memref<32x16xf32, #tpu.memory_space<vmem>>, %arg3: memref<16x32xf32, #tpu.memory_space<vmem>>, %arg4: memref<16x32xf32, #tpu.memory_space<vmem>>, %arg5: memref<1x32xf32, #tpu.memory_space<vmem>>, %arg6: memref<32x32xf32, #tpu.memory_space<vmem>>) attributes {dimension_semantics = [#tpu.dimension_semantics<parallel>], iteration_bounds = array<i64: 2>, scalar_prefetch = 0 : i64, scratch_operands = 0 : i64, tpu.core_type = #tpu.core_type<tc>, window_params = [{transform_indices = @transform_0, window_bounds = array<i64: 32, 16>}, {transform_indices = @transform_1, window_bounds = array<i64: 32, 16>}, {pipeline_mode = #tpu.pipeline_mode<synchronous>, transform_indices = @transform_2, window_bounds = array<i64: 16, 32>}, {pipeline_mode = #tpu.pipeline_mode<synchronous>, transform_indices = @transform_3, window_bounds = array<i64: 16, 32>}, {pipeline_mode = #tpu.pipeline_mode<synchronous>, transform_indices = @transform_4, window_bounds = array<i64: 1, 32>}, {transform_indices = @transform_5, window_bounds = array<i64: 32, 32>}]} {
    %c0 = arith.constant 0 : index
    %c0_0 = arith.constant 0 : index
    %0 = vector.load %arg1[%c0, %c0_0] : memref<32x16xf32, #tpu.memory_space<vmem>>, vector<32x16xf32>
    %c0_1 = arith.constant 0 : index
    %c0_2 = arith.constant 0 : index
    %1 = vector.load %arg3[%c0_1, %c0_2] : memref<16x32xf32, #tpu.memory_space<vmem>>, vector<16x32xf32>
    %cst = arith.constant dense<0.000000e+00> : vector<32x32xf32>
    %2 = tpu.matmul %0, %1, %cst {dimension_numbers = #tpu.dot_dimension_numbers<[1], [0], [0], [1], [0, 0, 1, 1], [], []>} : vector<32x16xf32>, vector<16x32xf32>, vector<32x32xf32> -> vector<32x32xf32>
    %c0_3 = arith.constant 0 : index
    %c0_4 = arith.constant 0 : index
    %3 = vector.load %arg2[%c0_3, %c0_4] : memref<32x16xf32, #tpu.memory_space<vmem>>, vector<32x16xf32>
    %c0_5 = arith.constant 0 : index
    %c0_6 = arith.constant 0 : index
    %4 = vector.load %arg4[%c0_5, %c0_6] : memref<16x32xf32, #tpu.memory_space<vmem>>, vector<16x32xf32>
    %cst_7 = arith.constant dense<0.000000e+00> : vector<32x32xf32>
    %5 = tpu.matmul %3, %4, %cst_7 {dimension_numbers = #tpu.dot_dimension_numbers<[1], [0], [0], [1], [0, 0, 1, 1], [], []>} : vector<32x16xf32>, vector<16x32xf32>, vector<32x32xf32> -> vector<32x32xf32>
    %6 = arith.addf %2, %5 : vector<32x32xf32>
    %c0_8 = arith.constant 0 : index
    %c0_9 = arith.constant 0 : index
    %7 = vector.load %arg5[%c0_8, %c0_9] : memref<1x32xf32, #tpu.memory_space<vmem>>, vector<1x32xf32>
    %8 = vector.broadcast %7 : vector<1x32xf32> to vector<32x32xf32>
    %9 = arith.addf %6, %8 : vector<32x32xf32>
    %c0_10 = arith.constant 0 : index
    %c0_11 = arith.constant 0 : index
    %10 = vector.load %arg6[%c0_10, %c0_11] : memref<32x32xf32, #tpu.memory_space<vmem>>, vector<32x32xf32>
    tpu.vector_store %arg6[%c0_10, %c0_11], %9 {strides = array<i32>} : memref<32x32xf32, #tpu.memory_space<vmem>>, vector<32x32xf32>,
    return
  }
  func.func @transform_0(%arg0: i32) -> (i32, i32) {
    %c0_i32 = arith.constant 0 : i32
    %c0_i32_0 = arith.constant 0 : i32
    return %arg0, %c0_i32 : i32, i32
  }
  func.func @transform_1(%arg0: i32) -> (i32, i32) {
    %c0_i32 = arith.constant 0 : i32
    %c0_i32_0 = arith.constant 0 : i32
    return %arg0, %c0_i32 : i32, i32
  }
  func.func @transform_2(%arg0: i32) -> (i32, i32) {
    %c0_i32 = arith.constant 0 : i32
    %c0_i32_0 = arith.constant 0 : i32
    %c0_i32_1 = arith.constant 0 : i32
    return %c0_i32, %c0_i32_0 : i32, i32
  }
  func.func @transform_3(%arg0: i32) -> (i32, i32) {
    %c0_i32 = arith.constant 0 : i32
    %c0_i32_0 = arith.constant 0 : i32
    %c0_i32_1 = arith.constant 0 : i32
    return %c0_i32, %c0_i32_0 : i32, i32
  }
  func.func @transform_4(%arg0: i32) -> (i32, i32) {
    %c0_i32 = arith.constant 0 : i32
    %c0_i32_0 = arith.constant 0 : i32
    %c0_i32_1 = arith.constant 0 : i32
    return %c0_i32, %c0_i32_0 : i32, i32
  }
  func.func @transform_5(%arg0: i32) -> (i32, i32) {
    %c0_i32 = arith.constant 0 : i32
    %c0_i32_0 = arith.constant 0 : i32
    return %arg0, %c0_i32 : i32, i32
  }
}

</mosaic_0001>

<llo_original>
// kernel: hf_input_projector.1
$region0: #{hf_input_projector.1}
  #allocation0 [shape = 'u32[]', space=smem, size = 0x4, offset = 0x4, fixed_abs, tag = 'smem constant byte address 0x4 - core index']
  #allocation1 [shape = 'u32[72,128]{1,0:T(1,128)}', space=vmem, size = 0x9000, scoped, tag = 'internal scratch']
  %s0 = inlined_call_operand.vmem [shape: f32[64,16], index: 0, kind: input, shape index: {}]
  %s1 = inlined_call_operand.vmem [shape: f32[64,16], index: 1, kind: input, shape index: {}]
  %s2 = inlined_call_operand.vmem [shape: f32[16,32], index: 2, kind: input, shape index: {}]
  %s3 = inlined_call_operand.vmem [shape: f32[16,32], index: 3, kind: input, shape index: {}]
  %s4 = inlined_call_operand.vmem [shape: f32[1,32], index: 4, kind: input, shape index: {}]
  %s5 = inlined_call_operand.hbm [shape: f32[64,32], index: 5, kind: output, shape index: {}]
  %s6 = sld [smem:[#allocation0]]
  $region53: #{hf_input_projector.1} parent=0
    _
  %s8 = ssub.s32 1, %s6
  %s9 = scalar_select 0, %s8, %s6
  $region1: #{hf_input_projector.1} parent=0
    #allocation2 [shape = 'u8[32768]{0}', space=vmem, size = 0x8000, scoped, tag = 'output window, operand 0']
    #allocation3 [shape = 's32[2]{0}', space=sflag, size = 0x8, scoped, tag = 'scoped memory for hf_input_projector.1']
    %10 = vsyncpa [#allocation3], 0
    %s11 = scalar_lea.sflag [#allocation3], 1
    %12 = vsyncpa %s11, 0
    loop: start=0, step=1, limit=4
    $region2: #{hf_input_projector.1} parent=1 // loop_pre_header
      _
    $region3: #{hf_input_projector.1} parent=1 // loop_header
      %s14 = sphi 0, %s18
      %p15 = scmp.ge.s32.totalorder %s14, 4
      %s24 = sphi 0, %s26
      %s27 = sphi 0, %s24
      %s28 = sphi 0, %s27
      %s44 = sphi 0, %s28
      %s50 = sphi 0, %s52
      %s53 = sphi 0, %s50
      %s54 = sphi 0, %s53
      %s70 = sphi 0, %s54
      %s74 = sphi 0, %s74
      %s76 = sphi 0, %s74
      %s77 = sphi 0, %s76
      %s91 = sphi 0, %s77
      %s95 = sphi 0, %s95
      %s97 = sphi 0, %s95
      %s98 = sphi 0, %s97
      %s112 = sphi 0, %s98
      %s116 = sphi 0, %s116
      %s118 = sphi 0, %s116
      %s119 = sphi 0, %s118
      %s133 = sphi 0, %s119
      %s139 = sphi 0, %s141
      %s142 = sphi 0, %s139
      %s143 = sphi 0, %s142
      %s159 = sphi 0, %s143
    $region4: #{hf_input_projector.1} parent=1 // loop_header_branch
      %17 = sbr.rel (%p15) target = $region8
    $region5: #{hf_input_projector.1} parent=1 // loop_body
      %s19 = ssub.s32 %s14, 1
      %s20 = ssub.s32 %s14, 2
      %s21 = sadd.s32 %s14, 1
      %s22 = ssub.s32 %s14, %s21
      %p23 = scmp.eq.s32.totalorder %s22, 0
      %s25 = sadd.s32 %s24, 1
      %s26 = scalar_select %p23, %s24, %s25
      %p29 = pneg %p23
      %p30 = scmp.eq.s32.totalorder %s14, 1
      %p31 = por %p29, %p30
      %p32 = scmp.ne.s32.totalorder %s24, %s27
      %p33 = scmp.eq.s32.totalorder %s14, 0
      %p34 = por %p32, %p33
      %p35 = scmp.ne.s32.totalorder %s24, %s27
      %p36 = scmp.eq.s32.totalorder %s19, 1
      %p37 = por %p35, %p36
      %p38 = scmp.ne.s32.totalorder %s27, %s28
      %p39 = scmp.eq.s32.totalorder %s19, 0
      %p40 = por %p38, %p39
      %p41 = scmp.ne.s32.totalorder %s27, %s28
      %p42 = scmp.eq.s32.totalorder %s20, 1
      %p43 = por %p41, %p42
      %p45 = scmp.ne.s32.totalorder %s28, %s44
      %p46 = scmp.eq.s32.totalorder %s20, 0
      %p47 = por %p45, %p46
      %s48 = ssub.s32 %s14, %s21
      %p49 = scmp.eq.s32.totalorder %s48, 0
      %s51 = sadd.s32 %s50, 1
      %s52 = scalar_select %p49, %s50, %s51
      %p55 = pneg %p49
      %p56 = scmp.eq.s32.totalorder %s14, 1
      %p57 = por %p55, %p56
      %p58 = scmp.ne.s32.totalorder %s50, %s53
      %p59 = scmp.eq.s32.totalorder %s14, 0
      %p60 = por %p58, %p59
      %p61 = scmp.ne.s32.totalorder %s50, %s53
      %p62 = scmp.eq.s32.totalorder %s19, 1
      %p63 = por %p61, %p62
      %p64 = scmp.ne.s32.totalorder %s53, %s54
      %p65 = scmp.eq.s32.totalorder %s19, 0
      %p66 = por %p64, %p65
      %p67 = scmp.ne.s32.totalorder %s53, %s54
      %p68 = scmp.eq.s32.totalorder %s20, 1
      %p69 = por %p67, %p68
      %p71 = scmp.ne.s32.totalorder %s54, %s70
      %p72 = scmp.eq.s32.totalorder %s20, 0
      %p73 = por %p71, %p72
      %s75 = sadd.s32 %s74, 1
      %p78 = scmp.eq.s32.totalorder %s14, 1
      %p79 = scmp.ne.s32.totalorder %s74, %s76
      %p80 = scmp.eq.s32.totalorder %s14, 0
      %p81 = por %p79, %p80
      %p82 = scmp.ne.s32.totalorder %s74, %s76
      %p83 = scmp.eq.s32.totalorder %s19, 1
      %p84 = por %p82, %p83
      %p85 = scmp.ne.s32.totalorder %s76, %s77
      %p86 = scmp.eq.s32.totalorder %s19, 0
      %p87 = por %p85, %p86
      %p88 = scmp.ne.s32.totalorder %s76, %s77
      %p89 = scmp.eq.s32.totalorder %s20, 1
      %p90 = por %p88, %p89
      %p92 = scmp.ne.s32.totalorder %s77, %s91
      %p93 = scmp.eq.s32.totalorder %s20, 0
      %p94 = por %p92, %p93
      %s96 = sadd.s32 %s95, 1
      %p99 = scmp.eq.s32.totalorder %s14, 1
      %p100 = scmp.ne.s32.totalorder %s95, %s97
      %p101 = scmp.eq.s32.totalorder %s14, 0
      %p102 = por %p100, %p101
      %p103 = scmp.ne.s32.totalorder %s95, %s97
      %p104 = scmp.eq.s32.totalorder %s19, 1
      %p105 = por %p103, %p104
      %p106 = scmp.ne.s32.totalorder %s97, %s98
      %p107 = scmp.eq.s32.totalorder %s19, 0
      %p108 = por %p106, %p107
      %p109 = scmp.ne.s32.totalorder %s97, %s98
      %p110 = scmp.eq.s32.totalorder %s20, 1
      %p111 = por %p109, %p110
      %p113 = scmp.ne.s32.totalorder %s98, %s112
      %p114 = scmp.eq.s32.totalorder %s20, 0
      %p115 = por %p113, %p114
      %s117 = sadd.s32 %s116, 1
      %p120 = scmp.eq.s32.totalorder %s14, 1
      %p121 = scmp.ne.s32.totalorder %s116, %s118
      %p122 = scmp.eq.s32.totalorder %s14, 0
      %p123 = por %p121, %p122
      %p124 = scmp.ne.s32.totalorder %s116, %s118
      %p125 = scmp.eq.s32.totalorder %s19, 1
      %p126 = por %p124, %p125
      %p127 = scmp.ne.s32.totalorder %s118, %s119
      %p128 = scmp.eq.s32.totalorder %s19, 0
      %p129 = por %p127, %p128
      %p130 = scmp.ne.s32.totalorder %s118, %s119
      %p131 = scmp.eq.s32.totalorder %s20, 1
      %p132 = por %p130, %p131
      %p134 = scmp.ne.s32.totalorder %s119, %s133
      %p135 = scmp.eq.s32.totalorder %s20, 0
      %p136 = por %p134, %p135
      %s137 = ssub.s32 %s14, %s21
      %p138 = scmp.eq.s32.totalorder %s137, 0
      %s140 = sadd.s32 %s139, 1
      %s141 = scalar_select %p138, %s139, %s140
      %p144 = pneg %p138
      %p145 = scmp.eq.s32.totalorder %s14, 1
      %p146 = por %p144, %p145
      %p147 = scmp.ne.s32.totalorder %s139, %s142
      %p148 = scmp.eq.s32.totalorder %s14, 0
      %p149 = por %p147, %p148
      %p150 = scmp.ne.s32.totalorder %s139, %s142
      %p151 = scmp.eq.s32.totalorder %s19, 1
      %p152 = por %p150, %p151
      %p153 = scmp.ne.s32.totalorder %s142, %s143
      %p154 = scmp.eq.s32.totalorder %s19, 0
      %p155 = por %p153, %p154
      %p156 = scmp.ne.s32.totalorder %s142, %s143
      %p157 = scmp.eq.s32.totalorder %s20, 1
      %p158 = por %p156, %p157
      %p160 = scmp.ne.s32.totalorder %s143, %s159
      %p161 = scmp.eq.s32.totalorder %s20, 0
      %p162 = por %p160, %p161
      %p163 = scmp.le.s32.totalorder 1, %s14
      %p164 = scmp.lt.s32.totalorder %s14, 3
      %p165 = pnand %p163, %p164
      %p166 = pneg %p165
      // Predicated region
      $region9: #{hf_input_projector.1} parent=5 // pred_check
        _
      $region10: #{hf_input_projector.1} parent=5 // pred_check_branch
        %168 = sbr.rel (%p165) target = $region12
      $region11: #{hf_input_projector.1} parent=5 // pred_region
        %s169 = ssub.s32 %s14, 1
        // Predicated region
        $region13: #{hf_input_projector.1} parent=11 // pred_check
          %p170 = pneg %p87
        $region14: #{hf_input_projector.1} parent=11 // pred_check_branch
          %172 = sbr.rel (%p170) target = $region16
        $region15: #{hf_input_projector.1} parent=11 // pred_region
          _
        $region16: #{hf_input_projector.1} parent=11 // pred_fallthru
          _
        // Predicated region
        $region17: #{hf_input_projector.1} parent=11 // pred_check
          %p173 = pneg %p108
        $region18: #{hf_input_projector.1} parent=11 // pred_check_branch
          %175 = sbr.rel (%p173) target = $region20
        $region19: #{hf_input_projector.1} parent=11 // pred_region
          _
        $region20: #{hf_input_projector.1} parent=11 // pred_fallthru
          _
        // Predicated region
        $region21: #{hf_input_projector.1} parent=11 // pred_check
          %p176 = pneg %p129
        $region22: #{hf_input_projector.1} parent=11 // pred_check_branch
          %178 = sbr.rel (%p176) target = $region24
        $region23: #{hf_input_projector.1} parent=11 // pred_region
          _
        $region24: #{hf_input_projector.1} parent=11 // pred_fallthru
          _
      $region12: #{hf_input_projector.1} parent=5 // pred_fallthru
        _
      %p179 = scmp.lt.s32.totalorder %s14, 2
      // Predicated region
      $region25: #{hf_input_projector.1} parent=5 // pred_check
        %p180 = pneg %p179
      $region26: #{hf_input_projector.1} parent=5 // pred_check_branch
        %182 = sbr.rel (%p180) target = $region28
      $region27: #{hf_input_projector.1} parent=5 // pred_region
        // Predicated region
        $region29: #{hf_input_projector.1} parent=27 // pred_check
          %p183 = pneg %p34
        $region30: #{hf_input_projector.1} parent=27 // pred_check_branch
          %185 = sbr.rel (%p183) target = $region32
        $region31: #{hf_input_projector.1} parent=27 // pred_region
          %s186 = smul.u32 4, %s14
          %p187 = scmp.lt.s32.totalorder %s186, 7
          %s188 = scalar_select %p187, %s186, 7
          %s189 = smul.addr %s188, 8
          %s190 = scalar_lea.vmem %s0, %s189
          %s191 = smul.u32 4, %s14
        $region32: #{hf_input_projector.1} parent=27 // pred_fallthru
          _
        // Predicated region
        $region33: #{hf_input_projector.1} parent=27 // pred_check
          %p192 = pneg %p60
        $region34: #{hf_input_projector.1} parent=27 // pred_check_branch
          %194 = sbr.rel (%p192) target = $region36
        $region35: #{hf_input_projector.1} parent=27 // pred_region
          %s195 = smul.u32 4, %s14
          %p196 = scmp.lt.s32.totalorder %s195, 7
          %s197 = scalar_select %p196, %s195, 7
          %s198 = smul.addr %s197, 8
          %s199 = scalar_lea.vmem %s1, %s198
          %s200 = smul.u32 4, %s14
        $region36: #{hf_input_projector.1} parent=27 // pred_fallthru
          _
      $region28: #{hf_input_projector.1} parent=5 // pred_fallthru
        _
      %p201 = scmp.le.s32.totalorder 1, %s14
      %p202 = scmp.lt.s32.totalorder %s14, 3
      %p203 = pnand %p201, %p202
      %p204 = pneg %p203
      // Predicated region
      $region37: #{hf_input_projector.1} parent=5 // pred_check
        _
      $region38: #{hf_input_projector.1} parent=5 // pred_check_branch
        %206 = sbr.rel (%p203) target = $region40
      $region39: #{hf_input_projector.1} parent=5 // pred_region
        %s207 = ssub.s32 %s14, 1
        %s208 = smul.u32 4, %s19
        %p209 = scmp.lt.s32.totalorder %s208, 7
        %s210 = scalar_select %p209, %s208, 7
        %s211 = smul.addr %s210, 8
        %s212 = scalar_lea.vmem %s0, %s211
        %p213 = pneg %p40
        %p214 = pneg %p37
        %s215 = smul.u32 4, %s19
        %p216 = scmp.lt.s32.totalorder %s215, 7
        %s217 = scalar_select %p216, %s215, 7
        %s218 = smul.addr %s217, 8
        %s219 = scalar_lea.vmem %s1, %s218
        %p220 = pneg %p66
        %p221 = pneg %p63
        %p222 = pneg %p87
        %p223 = pneg %p84
        %p224 = pneg %p108
        %p225 = pneg %p105
        %p226 = pneg %p129
        %p227 = pneg %p126
        %p228 = pneg %p155
        %p229 = pneg %p152
        %s230 = sand.u32 %s142, 1
        %s231 = scalar_lea.sflag [#allocation3], %s230
        %s232 = sand.u32 %s142, 1
        %s233 = smul.addr %s232, 32
        %s234 = scalar_lea.vmem [#allocation2], %s233
        %s235 = smul.u32 4, %s19
        %p236 = scmp.lt.s32.totalorder %s235, 7
        %s237 = scalar_select %p236, %s235, 7
        %s238 = smul.addr %s237, 8
        %s239 = scalar_lea.vmem %s0, %s238
        %s240 = smul.u32 4, %s19
        %s241 = smul.u32 4, %s19
        %p242 = scmp.lt.s32.totalorder %s241, 7
        %s243 = scalar_select %p242, %s241, 7
        %s244 = smul.addr %s243, 8
        %s245 = scalar_lea.vmem %s1, %s244
        %s246 = smul.u32 4, %s19
        %s247 = smul.u32 4, %s19
        %v248 = vld [vmem:[%s239] sm:$0xff]
        %v249 = vld [vmem:[%s239 + $0x8] sm:$0xff]
        %v250 = vld [vmem:[%s239 + $0x10] sm:$0xff]
        %v251 = vld [vmem:[%s239 + $0x18] sm:$0xff]
        %v252 = vld [vmem:[%s2] sm:$0xff]
        %v253 = vld [vmem:[%s2 + $0x8] sm:$0xff]
        %v254 = vld [vmem:[%s245] sm:$0xff]
        %v255 = vld [vmem:[%s245 + $0x8] sm:$0xff]
        %v256 = vld [vmem:[%s245 + $0x10] sm:$0xff]
        %v257 = vld [vmem:[%s245 + $0x18] sm:$0xff]
        %v258 = vld [vmem:[%s3] sm:$0xff]
        %v259 = vld [vmem:[%s3 + $0x8] sm:$0xff]
        %vm260 = vcmask 130048
        %v262 = vsel %vm260, %v254, 0
        %v265 = vsel %vm260, %v255, 0
        %v268 = vsel %vm260, %v256, 0
        %v271 = vsel %vm260, %v257, 0
        %273 = vmatpush.msra.mxu0 0.0
        %274 = vmatpush.msra.mxu0 0.0
        %275 = vmatpush.msra.mxu0 0.0
        %276 = vmatpush.msra.mxu0 0.0
        %277 = vmatpush.msra.mxu0 0.0
        %278 = vmatpush.msra.mxu0 0.0
        %279 = vmatpush.msra.mxu0 0.0
        %280 = vmatpush.msra.mxu0 0.0
        %281 = vmatpush.msra.mxu0 0.0
        %282 = vmatpush.msra.mxu0 0.0
        %283 = vmatpush.msra.mxu0 0.0
        %284 = vmatpush.msra.mxu0 0.0
        %285 = vmatpush.msra.mxu0 0.0
        %286 = vmatpush.msra.mxu0 0.0
        %287 = vmatpush.msra.mxu0 %v259
        %288 = vmatpush.msra.mxu0 %v258
        %289 = vmatmul.f32.gmra.mxu0 %v262
        %v290 = vpop.f32.mrf.mxu0
        %v291 = vadd.f32 0.0, %v290
        %292 = vmatmul.f32.gmra.mxu0 %v265
        %v293 = vpop.f32.mrf.mxu0
        %v294 = vadd.f32 0.0, %v293
        %295 = vmatmul.f32.gmra.mxu0 %v268
        %v296 = vpop.f32.mrf.mxu0
        %v297 = vadd.f32 0.0, %v296
        %298 = vmatmul.f32.gmra.mxu0 %v271
        %v299 = vpop.f32.mrf.mxu0
        %v300 = vadd.f32 0.0, %v299
        %301 = vdwg.mxu0
        %v303 = vsel %vm260, %v248, 0
        %v306 = vsel %vm260, %v249, 0
        %v309 = vsel %vm260, %v250, 0
        %v312 = vsel %vm260, %v251, 0
        %314 = vmatpush.msra.mxu0 0.0
        %315 = vmatpush.msra.mxu0 0.0
        %316 = vmatpush.msra.mxu0 0.0
        %317 = vmatpush.msra.mxu0 0.0
        %318 = vmatpush.msra.mxu0 0.0
        %319 = vmatpush.msra.mxu0 0.0
        %320 = vmatpush.msra.mxu0 0.0
        %321 = vmatpush.msra.mxu0 0.0
        %322 = vmatpush.msra.mxu0 0.0
        %323 = vmatpush.msra.mxu0 0.0
        %324 = vmatpush.msra.mxu0 0.0
        %325 = vmatpush.msra.mxu0 0.0
        %326 = vmatpush.msra.mxu0 0.0
        %327 = vmatpush.msra.mxu0 0.0
        %328 = vmatpush.msra.mxu0 %v253
        %329 = vmatpush.msra.mxu0 %v252
        %330 = vmatmul.f32.gmra.mxu0 %v303
        %v331 = vpop.f32.mrf.mxu0
        %v332 = vadd.f32 %v291, %v331
        %333 = vmatmul.f32.gmra.mxu0 %v306
        %v334 = vpop.f32.mrf.mxu0
        %v335 = vadd.f32 %v294, %v334
        %336 = vmatmul.f32.gmra.mxu0 %v309
        %v337 = vpop.f32.mrf.mxu0
        %v338 = vadd.f32 %v297, %v337
        %339 = vmatmul.f32.gmra.mxu0 %v312
        %v340 = vpop.f32.mrf.mxu0
        %v341 = vadd.f32 %v300, %v340
        %342 = vdwg.mxu0
        %v343 = vld [vmem:[%s4] sm:$0x1]
        %v345 = vperm.slane %v343, 0
        %v347 = vadd.f32 %v332, %v345
        %v348 = vadd.f32 %v335, %v345
        %v349 = vadd.f32 %v338, %v345
        %v350 = vadd.f32 %v341, %v345
        %vm351 = vcmask 261120
        %352 = vst.msk [vmem:[%s234] sm:$0xff] %vm351, %v347
        %353 = vst.msk [vmem:[%s234 + $0x8] sm:$0xff] %vm351, %v348
        %354 = vst.msk [vmem:[%s234 + $0x10] sm:$0xff] %vm351, %v349
        %355 = vst.msk [vmem:[%s234 + $0x18] sm:$0xff] %vm351, %v350
        %s356 = sand.u32 %s142, 1
        %s357 = scalar_lea.sflag [#allocation3], %s356
        %s358 = sand.u32 %s142, 1
        %s359 = smul.addr %s358, 32
        %s360 = scalar_lea.vmem [#allocation2], %s359
        // Predicated region
        $region41: #{hf_input_projector.1} parent=39 // pred_check
          %p361 = pneg %p152
        $region42: #{hf_input_projector.1} parent=39 // pred_check_branch
          %363 = sbr.rel (%p361) target = $region44
        $region43: #{hf_input_projector.1} parent=39 // pred_region
          %s364 = smul.u32 4, %s19
          %366 = vsyncadd %s357, 0
          %s367 = smul.addr %s364, 8
          %s368 = scalar_lea.hbm %s5, %s367
          %s369 = sshll.u32 %s360, 4
          %s370 = int_to_ptr.vmem [resolvable:$true] %s369
          %s371 = sshll.u32 %s368, 4
          %s372 = int_to_ptr.hbm [resolvable:$true] %s371
          %377 = dma.vmem_to_hbm [thread:$0]  %s370, 512, %s372, %s357, 128, 128, 8
        $region44: #{hf_input_projector.1} parent=39 // pred_fallthru
          _
      $region40: #{hf_input_projector.1} parent=5 // pred_fallthru
        _
      %p378 = scmp.le.s32.totalorder 2, %s14
      // Predicated region
      $region45: #{hf_input_projector.1} parent=5 // pred_check
        %p379 = pneg %p378
      $region46: #{hf_input_projector.1} parent=5 // pred_check_branch
        %381 = sbr.rel (%p379) target = $region48
      $region47: #{hf_input_projector.1} parent=5 // pred_region
        %s382 = ssub.s32 %s14, 2
        // Predicated region
        $region49: #{hf_input_projector.1} parent=47 // pred_check
          %p383 = pneg %p158
        $region50: #{hf_input_projector.1} parent=47 // pred_check_branch
          %385 = sbr.rel (%p383) target = $region52
        $region51: #{hf_input_projector.1} parent=47 // pred_region
          %s386 = sand.u32 %s143, 1
          %s387 = scalar_lea.sflag [#allocation3], %s386
          %s388 = sand.u32 %s143, 1
          %s389 = smul.addr %s388, 32
          %s390 = scalar_lea.vmem [#allocation2], %s389
          %392 = dma.done %s387, 512
        $region52: #{hf_input_projector.1} parent=47 // pred_fallthru
          _
      $region48: #{hf_input_projector.1} parent=5 // pred_fallthru
        _
    $region6: #{hf_input_projector.1} parent=1 // loop_footer
      %s18 = sadd.s32 1, %s14
    $region7: #{hf_input_projector.1} parent=1 // loop_footer_branch
      %13 = sbr.rel target = $region3
    $region8: #{hf_input_projector.1} parent=1 // loop_exit
      _
    %393 = vsyncpa [#allocation3], 1
    %s394 = scalar_lea.sflag [#allocation3], 1
    %395 = vsyncpa %s394, 1

</llo_original>
